<compile_context>
chip_gen: v7x
topology: tpu7x:2x2x1
jax: 0.10.0
libtpu: 0.0.40
codegen_flags: <defaults>
</compile_context>

<pallas_src>
import jax
import jax.numpy as jnp
from jax.experimental import pallas as pl
from jax.experimental.pallas import tpu as pltpu

IMAGENET_MEAN = [0.485, 0.456, 0.406]
IMAGENET_STD = [0.229, 0.224, 0.225]

# ~2 MiB of f32 per input tile -> 2 streams (x-in, out) * 2 buffers * 2 MiB
# + tiny scale/bias buffers stays well under the 16 MiB default scoped VMEM.
_TILE_ELEMS_BUDGET = 512 * 1024


def get_imagenet_params(resol):
    """Deterministic parameter setup, mirroring the PyTorch __init__."""
    mean = jnp.stack(
        [jnp.full((resol, resol), m, dtype=jnp.float32) for m in IMAGENET_MEAN]
    )[None]  # (1, 3, resol, resol)
    std = jnp.stack(
        [jnp.full((resol, resol), s, dtype=jnp.float32) for s in IMAGENET_STD]
    )[None]  # (1, 3, resol, resol)
    return mean, std


def _inverse_imagenet_kernel(x_ref, scale_ref, bias_ref, o_ref):
    # o = x * (std*255) + (mean*255); scale/bias are (TR, 1) per-row constants
    # broadcast across the lane dimension.
    o_ref[...] = x_ref[...] * scale_ref[...] + bias_ref[...]


def _pick_tiles(rows, cols):
    """Choose (TR, TC) satisfying the (8,128)-or-full-dim rule with ~2MiB tiles."""
    if rows <= 1024:
        tr = rows                      # full-dim block: always legal
    else:
        tr = 512                       # multiple of 8
    tc_cap = max(128, ((_TILE_ELEMS_BUDGET // tr) // 128) * 128)
    tc = cols if cols <= tc_cap else tc_cap  # full-dim or multiple of 128
    return tr, tc


def inverse_imagenet_transform(x, mean, std):
    """x: (N, C, H, W) float32; mean/std: (1, C, H, W) float32."""
    n, c, h, w = x.shape
    assert mean.shape == (1, c, h, w) and std.shape == (1, c, h, w)

    rows, cols = n * c, h * w
    x2 = x.reshape(rows, cols)  # lane-dense 2D view (free reshape, contiguous)

    # Per-channel constants folded with the *255 factor, replicated per row.
    scale_c = std[0, :, 0, 0].astype(jnp.float32) * 255.0   # (C,)
    bias_c = mean[0, :, 0, 0].astype(jnp.float32) * 255.0   # (C,)
    scale_rows = jnp.tile(scale_c, n).reshape(rows, 1)       # (N*C, 1)
    bias_rows = jnp.tile(bias_c, n).reshape(rows, 1)         # (N*C, 1)

    tr, tc = _pick_tiles(rows, cols)
    n_row_tiles = pl.cdiv(rows, tr)
    n_col_tiles = pl.cdiv(cols, tc)

    out2 = pl.pallas_call(
        _inverse_imagenet_kernel,
        out_shape=jax.ShapeDtypeStruct((rows, cols), x.dtype),
        grid_spec=pltpu.PrefetchScalarGridSpec(
            num_scalar_prefetch=0,
            # Column-tile axis leads: long, evenly divisible parallel axis
            # for v7x megacore sharding.
            grid=(n_col_tiles, n_row_tiles),
            in_specs=[
                pl.BlockSpec((tr, tc), lambda j, i: (i, j)),   # x slab
                pl.BlockSpec((tr, 1), lambda j, i: (i, 0)),    # scale (tiny)
                pl.BlockSpec((tr, 1), lambda j, i: (i, 0)),    # bias (tiny)
            ],
            out_specs=pl.BlockSpec((tr, tc), lambda j, i: (i, j)),
        ),
        compiler_params=pltpu.CompilerParams(
            dimension_semantics=("parallel", "parallel")
        ),
    )(x2, scale_rows, bias_rows)

    return out2.reshape(n, c, h, w)


class InverseImagenetTransform:
    """JAX/Pallas equivalent of the PyTorch module."""

    def __init__(self, resol):
        self.mean, self.std = get_imagenet_params(resol)

    def __call__(self, x):
        return inverse_imagenet_transform(x, self.mean, self.std)


if __name__ == "__main__":
    key = jax.random.PRNGKey(0)
    batch, channels, resol = 2, 3, 16  # channels fixed at 3 (ImageNet RGB stats)

    # Simulate an ImageNet-normalized image: ([0,1] - mean) / std
    raw = jax.random.uniform(key, (batch, channels, resol, resol), dtype=jnp.float32)
    mean, std = get_imagenet_params(resol)
    x = (raw - mean) / std

    mod = InverseImagenetTransform(resol)
    out = mod(x)
    out = jax.block_until_ready(out)

    # Reference check in plain JAX (same op order as the PyTorch module).
    ref = (x * std + mean) * 255.0
    assert out.shape == (batch, channels, resol, resol)
    assert jnp.allclose(out, ref, atol=1e-3, rtol=1e-5), "mismatch vs reference"

    print("KERNEL_OK")
</pallas_src>

<mosaic_0001>
module attributes {stable_mosaic.version = 11 : i64} {
  func.func @_inverse_imagenet_kernel(%arg0: i32, %arg1: i32, %arg2: memref<6x256xf32, #tpu.memory_space<vmem>>, %arg3: memref<6x1xf32, #tpu.memory_space<vmem>>, %arg4: memref<6x1xf32, #tpu.memory_space<vmem>>, %arg5: memref<6x256xf32, #tpu.memory_space<vmem>>) attributes {dimension_semantics = [#tpu.dimension_semantics<parallel>, #tpu.dimension_semantics<parallel>], iteration_bounds = array<i64: 1, 1>, scalar_prefetch = 0 : i64, scratch_operands = 0 : i64, tpu.core_type = #tpu.core_type<tc>, window_params = [{transform_indices = @transform_0, window_bounds = array<i64: 6, 256>}, {transform_indices = @transform_1, window_bounds = array<i64: 6, 1>}, {transform_indices = @transform_2, window_bounds = array<i64: 6, 1>}, {transform_indices = @transform_3, window_bounds = array<i64: 6, 256>}]} {
    %c0 = arith.constant 0 : index
    %c0_0 = arith.constant 0 : index
    %0 = vector.load %arg2[%c0, %c0_0] : memref<6x256xf32, #tpu.memory_space<vmem>>, vector<6x256xf32>
    %c0_1 = arith.constant 0 : index
    %c0_2 = arith.constant 0 : index
    %1 = vector.load %arg3[%c0_1, %c0_2] : memref<6x1xf32, #tpu.memory_space<vmem>>, vector<6x1xf32>
    %2 = vector.broadcast %1 : vector<6x1xf32> to vector<6x256xf32>
    %3 = arith.mulf %0, %2 : vector<6x256xf32>
    %c0_3 = arith.constant 0 : index
    %c0_4 = arith.constant 0 : index
    %4 = vector.load %arg4[%c0_3, %c0_4] : memref<6x1xf32, #tpu.memory_space<vmem>>, vector<6x1xf32>
    %5 = vector.broadcast %4 : vector<6x1xf32> to vector<6x256xf32>
    %6 = arith.addf %3, %5 : vector<6x256xf32>
    %c0_5 = arith.constant 0 : index
    %c0_6 = arith.constant 0 : index
    %7 = vector.load %arg5[%c0_5, %c0_6] : memref<6x256xf32, #tpu.memory_space<vmem>>, vector<6x256xf32>
    tpu.vector_store %arg5[%c0_5, %c0_6], %6 {strides = array<i32>} : memref<6x256xf32, #tpu.memory_space<vmem>>, vector<6x256xf32>,
    return
  }
  func.func @transform_0(%arg0: i32, %arg1: i32) -> (i32, i32) {
    %c0_i32 = arith.constant 0 : i32
    return %arg1, %arg0 : i32, i32
  }
  func.func @transform_1(%arg0: i32, %arg1: i32) -> (i32, i32) {
    %c0_i32 = arith.constant 0 : i32
    %c0_i32_0 = arith.constant 0 : i32
    return %arg1, %c0_i32 : i32, i32
  }
  func.func @transform_2(%arg0: i32, %arg1: i32) -> (i32, i32) {
    %c0_i32 = arith.constant 0 : i32
    %c0_i32_0 = arith.constant 0 : i32
    return %arg1, %c0_i32 : i32, i32
  }
  func.func @transform_3(%arg0: i32, %arg1: i32) -> (i32, i32) {
    %c0_i32 = arith.constant 0 : i32
    return %arg1, %arg0 : i32, i32
  }
}

</mosaic_0001>

<llo_original>
// kernel: tpu_custom_call.1
$region0: #{tpu_custom_call.1}
  #allocation0 [shape = 'u32[]', space=smem, size = 0x4, offset = 0x4, fixed_abs, tag = 'smem constant byte address 0x4 - core index']
  #allocation1 [shape = 'u32[144,128]{1,0:T(1,128)}', space=vmem, size = 0x12000, scoped, tag = 'internal scratch']
  %s0 = inlined_call_operand.vmem [shape: f32[6,256], index: 0, kind: input, shape index: {}]
  %s1 = inlined_call_operand.vmem [shape: f32[6,1], index: 1, kind: input, shape index: {}]
  %s2 = inlined_call_operand.vmem [shape: f32[6,1], index: 2, kind: input, shape index: {}]
  %s3 = inlined_call_operand.hbm [shape: f32[6,256], index: 3, kind: output, shape index: {}]
  %s4 = sld [smem:[#allocation0]]
  $region22: #{tpu_custom_call.1} parent=0
    _
  %s6 = ssub.s32 1, %s4
  %s7 = scalar_select 0, %s6, %s4
  $region1: #{tpu_custom_call.1} parent=0
    #allocation2 [shape = 'u8[8192]{0}', space=vmem, size = 0x2000, scoped, tag = 'output window, operand 0, single buffered']
    #allocation3 [shape = 's32[1]{0}', space=sflag, size = 0x4, scoped, tag = 'scoped memory for tpu_custom_call.1']
    %8 = vsyncpa [#allocation3], 0
    // Predicated region
    $region2: #{tpu_custom_call.1} parent=1 // pred_check
      _
    $region3: #{tpu_custom_call.1} parent=1 // pred_check_branch
      %10 = sbr.rel (0) target = $region5
    $region4: #{tpu_custom_call.1} parent=1 // pred_region
      _
    $region5: #{tpu_custom_call.1} parent=1 // pred_fallthru
      _
    // Predicated region
    $region6: #{tpu_custom_call.1} parent=1 // pred_check
      _
    $region7: #{tpu_custom_call.1} parent=1 // pred_check_branch
      %12 = sbr.rel (0) target = $region9
    $region8: #{tpu_custom_call.1} parent=1 // pred_region
      _
    $region9: #{tpu_custom_call.1} parent=1 // pred_fallthru
      _
    // Predicated region
    $region10: #{tpu_custom_call.1} parent=1 // pred_check
      _
    $region11: #{tpu_custom_call.1} parent=1 // pred_check_branch
      %14 = sbr.rel (0) target = $region13
    $region12: #{tpu_custom_call.1} parent=1 // pred_region
      _
    $region13: #{tpu_custom_call.1} parent=1 // pred_fallthru
      _
    %v15 = vld [vmem:[%s0] sm:$0x3f]
    %v16 = vld [vmem:[%s0 + $0x8] sm:$0x3f]
    %v17 = vld [vmem:[%s1] sm:$0x3f]
    %19 = vset.pattern.permute.xlu0 0
    %20 = vperm.xlu0 %19, %v17
    %v21 = vpop.permute.xlu0 %20
    %v23 = vmul.f32 %v15, %v21
    %v24 = vmul.f32 %v16, %v21
    %v25 = vld [vmem:[%s2] sm:$0x3f]
    %27 = vset.pattern.permute.xlu0 0
    %28 = vperm.xlu0 %27, %v25
    %v29 = vpop.permute.xlu0 %28
    %v31 = vadd.f32 %v23, %v29
    %v32 = vadd.f32 %v24, %v29
    %33 = vst [vmem:[#allocation2] sm:$0x3f] %v31
    %34 = vst [vmem:[#allocation2 + $0x8] sm:$0x3f] %v32
    // Predicated region
    $region14: #{tpu_custom_call.1} parent=1 // pred_check
      _
    $region15: #{tpu_custom_call.1} parent=1 // pred_check_branch
      %36 = sbr.rel (0) target = $region17
    $region16: #{tpu_custom_call.1} parent=1 // pred_region
      %s38 = ssub.s32 256, 256
      %39 = vsyncadd [#allocation3], %s38
      %s41 = sshll.u32 [#allocation2], 4
      %s42 = int_to_ptr.vmem [resolvable:$true] %s41
      %44 = dma.vmem_to_hbm [thread:$0]  %s42, 256, %s3, [#allocation3]
    $region17: #{tpu_custom_call.1} parent=1 // pred_fallthru
      _
    // Predicated region
    $region18: #{tpu_custom_call.1} parent=1 // pred_check
      _
    $region19: #{tpu_custom_call.1} parent=1 // pred_check_branch
      %46 = sbr.rel (0) target = $region21
    $region20: #{tpu_custom_call.1} parent=1 // pred_region
      %47 = dma.done [#allocation3], 256
    $region21: #{tpu_custom_call.1} parent=1 // pred_fallthru
      _
    %48 = vsyncpa [#allocation3], 1

</llo_original>
